<compile_context>
chip_gen: v5e
topology: v5e:2x2
jax: 0.10.0
libtpu: 0.0.40
codegen_flags: <defaults>
</compile_context>

<pallas_src>
import numpy as np
import jax
import jax.numpy as jnp
from jax.experimental import pallas as pl
from jax.experimental.pallas import tpu as pltpu


_SENTINEL = jnp.iinfo(jnp.int32).min  # can never appear as a real user id


def usr_emb_kernel(x_ref, ul_ref, emb_ref, o_ref):
    # x_ref:   (TILE_N, 1)   int32   flattened raw user ids (one tile)
    # ul_ref:  (1, U_pad)    int32   sentinel-padded USERLIST (VMEM resident)
    # emb_ref: (U_pad, E)    float32 embedding table, E unpadded (resident)
    # o_ref:   (TILE_N, E)   float32
    x = x_ref[...]                                    # (TILE_N, 1)
    ul = ul_ref[...]                                  # (1, U_pad)
    # "find index in USERLIST" as a lane-dense one-hot compare (VPU).
    onehot = (x == ul).astype(jnp.float32)            # (TILE_N, U_pad)
    # embedding gather == one-hot @ table on the MXU.  E is deliberately NOT
    # padded to 128, so the store and HBM writeback touch only real bytes.
    o_ref[...] = jnp.dot(onehot, emb_ref[...],
                         preferred_element_type=jnp.float32)


def make_usr_emb(userlist, emb_table, *, tile_n=2048):
    """Builds the forward fn; pads USERLIST / table ONCE (hoisted out of calls)."""
    U, E = emb_table.shape
    assert userlist.shape == (U,)

    U_pad = pl.cdiv(U, 128) * 128
    ul_row = jnp.full((1, U_pad), _SENTINEL, dtype=jnp.int32)
    ul_row = ul_row.at[0, :U].set(userlist.astype(jnp.int32))
    table = jnp.zeros((U_pad, E), dtype=jnp.float32)
    table = table.at[:U, :].set(emb_table.astype(jnp.float32))

    tile_n = max(8, (int(tile_n) // 8) * 8)           # multiple of 8 sublanes

    @jax.jit
    def forward(x):
        B, S = x.shape
        N = B * S

        # Cap the tile at ceil(N/2) (rounded up to 8 sublanes) so the
        # "parallel" grid has >= 2 steps and shards across both v7x cores.
        half = pl.cdiv(pl.cdiv(N, 2), 8) * 8
        tile = max(8, min(tile_n, half))
        N_pad = pl.cdiv(N, tile) * tile
        grid = (N_pad // tile,)

        ids = x.reshape(N).astype(jnp.int32)
        if N_pad == N:
            x_flat = ids.reshape(N, 1)
        else:
            # pad rows use the sentinel -> all-zero rows, sliced off below
            x_flat = jnp.full((N_pad, 1), _SENTINEL, dtype=jnp.int32)
            x_flat = x_flat.at[:N, 0].set(ids)

        cost = pl.CostEstimate(
            flops=2 * N_pad * U_pad * E,
            transcendentals=0,
            bytes_accessed=(N_pad * 4 + U_pad * 4 + U_pad * E * 4
                            + N_pad * E * 4),
        )

        out_flat = pl.pallas_call(
            usr_emb_kernel,
            out_shape=jax.ShapeDtypeStruct((N_pad, E), jnp.float32),
            grid_spec=pltpu.PrefetchScalarGridSpec(
                num_scalar_prefetch=0,
                grid=grid,
                in_specs=[
                    # token-id tile: pipelined along the grid
                    pl.BlockSpec((tile, 1), lambda i: (i, 0)),
                    # USERLIST + table: constant index_map -> VMEM resident
                    # across all grid iterations (tiny: ~16 KiB total).
                    pl.BlockSpec((1, U_pad), lambda i: (0, 0)),
                    pl.BlockSpec((U_pad, E), lambda i: (0, 0)),
                ],
                out_specs=pl.BlockSpec((tile, E), lambda i: (i, 0)),
            ),
            compiler_params=pltpu.CompilerParams(
                dimension_semantics=("parallel",),
            ),
            cost_estimate=cost,
        )(x_flat, ul_row, table)

        if N_pad != N:
            out_flat = out_flat[:N]
        return out_flat.reshape(B, S, E)

    return forward


if __name__ == "__main__":
    key = jax.random.PRNGKey(0)
    k_emb, k_pick = jax.random.split(key, 2)

    # module config (small, deterministic)
    usr_size_raw = 15                 # param.usr_size
    usr_size = usr_size_raw + 1       # +1 for the prepended -1 slot
    usr_emb_size = 32
    B, S = 2, 8

    # USERLIST = [-1] + param.USERLIST  (synthetic raw user ids)
    raw_user_ids = np.arange(1000, 1000 + usr_size_raw, dtype=np.int32)
    userlist = jnp.asarray(np.append(np.int32(-1), raw_user_ids))     # (U,)

    # nn.Embedding(usr_size, usr_emb_size) weight, deterministic init
    emb_table = jax.random.normal(k_emb, (usr_size, usr_emb_size),
                                  dtype=jnp.float32)

    # input x: (B, S) raw user ids drawn from USERLIST (incl. the -1 slot),
    # matching the PyTorch module whose np.where lookup requires membership.
    idx = jax.random.randint(k_pick, (B, S), 0, usr_size)
    x = userlist[idx]                                                  # (B, S)

    usr_emb = make_usr_emb(userlist, emb_table)
    out = jax.block_until_ready(usr_emb(x))

    # reference check (plain JAX): map ids -> indices, then gather
    ref_idx = jnp.argmax(x[..., None] == userlist[None, None, :], axis=-1)
    ref = emb_table[ref_idx]
    assert out.shape == (B, S, usr_emb_size)
    np.testing.assert_allclose(np.asarray(out), np.asarray(ref),
                               rtol=1e-6, atol=1e-6)

    print("KERNEL_OK")
</pallas_src>

<mosaic_0001>
module attributes {stable_mosaic.version = 11 : i64} {
  func.func @usr_emb_kernel(%arg0: i32, %arg1: memref<8x1xi32, #tpu.memory_space<vmem>>, %arg2: memref<1x128xi32, #tpu.memory_space<vmem>>, %arg3: memref<128x32xf32, #tpu.memory_space<vmem>>, %arg4: memref<8x32xf32, #tpu.memory_space<vmem>>) attributes {dimension_semantics = [#tpu.dimension_semantics<parallel>], iteration_bounds = array<i64: 2>, scalar_prefetch = 0 : i64, scratch_operands = 0 : i64, tpu.core_type = #tpu.core_type<tc>, window_params = [{transform_indices = @transform_0, window_bounds = array<i64: 8, 1>}, {pipeline_mode = #tpu.pipeline_mode<synchronous>, transform_indices = @transform_1, window_bounds = array<i64: 1, 128>}, {pipeline_mode = #tpu.pipeline_mode<synchronous>, transform_indices = @transform_2, window_bounds = array<i64: 128, 32>}, {transform_indices = @transform_3, window_bounds = array<i64: 8, 32>}]} {
    %c0 = arith.constant 0 : index
    %c0_0 = arith.constant 0 : index
    %0 = vector.load %arg1[%c0, %c0_0] : memref<8x1xi32, #tpu.memory_space<vmem>>, vector<8x1xi32>
    %c0_1 = arith.constant 0 : index
    %c0_2 = arith.constant 0 : index
    %1 = vector.load %arg2[%c0_1, %c0_2] : memref<1x128xi32, #tpu.memory_space<vmem>>, vector<1x128xi32>
    %2 = vector.broadcast %0 : vector<8x1xi32> to vector<8x128xi32>
    %3 = vector.broadcast %1 : vector<1x128xi32> to vector<8x128xi32>
    %4 = arith.cmpi eq, %2, %3 : vector<8x128xi32>
    %5 = arith.extui %4 : vector<8x128xi1> to vector<8x128xi32>
    %6 = arith.sitofp %5 : vector<8x128xi32> to vector<8x128xf32>
    %c0_3 = arith.constant 0 : index
    %c0_4 = arith.constant 0 : index
    %7 = vector.load %arg3[%c0_3, %c0_4] : memref<128x32xf32, #tpu.memory_space<vmem>>, vector<128x32xf32>
    %cst = arith.constant dense<0.000000e+00> : vector<8x32xf32>
    %8 = tpu.matmul %6, %7, %cst {dimension_numbers = #tpu.dot_dimension_numbers<[1], [0], [0], [1], [0, 0, 1, 1], [], []>} : vector<8x128xf32>, vector<128x32xf32>, vector<8x32xf32> -> vector<8x32xf32>
    %c0_5 = arith.constant 0 : index
    %c0_6 = arith.constant 0 : index
    %9 = vector.load %arg4[%c0_5, %c0_6] : memref<8x32xf32, #tpu.memory_space<vmem>>, vector<8x32xf32>
    tpu.vector_store %arg4[%c0_5, %c0_6], %8 {strides = array<i32>} : memref<8x32xf32, #tpu.memory_space<vmem>>, vector<8x32xf32>,
    return
  }
  func.func @transform_0(%arg0: i32) -> (i32, i32) {
    %c0_i32 = arith.constant 0 : i32
    %c0_i32_0 = arith.constant 0 : i32
    return %arg0, %c0_i32 : i32, i32
  }
  func.func @transform_1(%arg0: i32) -> (i32, i32) {
    %c0_i32 = arith.constant 0 : i32
    %c0_i32_0 = arith.constant 0 : i32
    %c0_i32_1 = arith.constant 0 : i32
    return %c0_i32, %c0_i32_0 : i32, i32
  }
  func.func @transform_2(%arg0: i32) -> (i32, i32) {
    %c0_i32 = arith.constant 0 : i32
    %c0_i32_0 = arith.constant 0 : i32
    %c0_i32_1 = arith.constant 0 : i32
    return %c0_i32, %c0_i32_0 : i32, i32
  }
  func.func @transform_3(%arg0: i32) -> (i32, i32) {
    %c0_i32 = arith.constant 0 : i32
    %c0_i32_0 = arith.constant 0 : i32
    return %arg0, %c0_i32 : i32, i32
  }
}

</mosaic_0001>

<llo_original>
// kernel: forward.1
$region0: #{forward.1}
  #allocation0 [shape = 'u32[]', space=smem, size = 0x4, offset = 0x4, fixed_abs, tag = 'smem constant byte address 0x4 - core index']
  #allocation1 [shape = 'u32[72,128]{1,0:T(1,128)}', space=vmem, size = 0x9000, scoped, tag = 'internal scratch']
  %s0 = inlined_call_operand.vmem [shape: s32[16,1], index: 0, kind: input, shape index: {}]
  %s1 = inlined_call_operand.vmem [shape: s32[1,128], index: 1, kind: input, shape index: {}]
  %s2 = inlined_call_operand.hbm [shape: f32[128,32], index: 2, kind: input, shape index: {}]
  %s3 = inlined_call_operand.hbm [shape: f32[16,32], index: 3, kind: output, shape index: {}]
  %s4 = sld [smem:[#allocation0]]
  $region49: #{forward.1} parent=0
    _
  %s6 = ssub.s32 1, %s4
  %s7 = scalar_select 0, %s6, %s4
  $region1: #{forward.1} parent=0
    #allocation2 [shape = 'u8[65536]{0}', space=vmem, size = 0x10000, scoped, tag = 'input window, operand 2, single buffered']
    #allocation3 [shape = 's32[2]{0}', space=sflag, size = 0x8, scoped, tag = 'scoped memory for forward.1']
    #allocation4 [shape = 's32[2]{0}', space=sflag, size = 0x8, scoped, tag = 'scoped memory for forward.1']
    #allocation5 [shape = 'u8[8192]{0}', space=vmem, size = 0x2000, scoped, tag = 'output window, operand 0']
    %8 = vsyncpa [#allocation3], 0
    %9 = vsyncpa [#allocation4], 0
    %s10 = scalar_lea.sflag [#allocation4], 1
    %11 = vsyncpa %s10, 0
    loop: start=0, step=1, limit=4
    $region2: #{forward.1} parent=1 // loop_pre_header
      _
    $region3: #{forward.1} parent=1 // loop_header
      %s13 = sphi 0, %s17
      %p14 = scmp.ge.s32.totalorder %s13, 4
      %s23 = sphi 0, %s25
      %s26 = sphi 0, %s23
      %s27 = sphi 0, %s26
      %s43 = sphi 0, %s27
      %s47 = sphi 0, %s47
      %s49 = sphi 0, %s47
      %s50 = sphi 0, %s49
      %s64 = sphi 0, %s50
      %s68 = sphi 0, %s68
      %s70 = sphi 0, %s68
      %s71 = sphi 0, %s70
      %s85 = sphi 0, %s71
      %s91 = sphi 0, %s93
      %s94 = sphi 0, %s91
      %s95 = sphi 0, %s94
      %s111 = sphi 0, %s95
    $region4: #{forward.1} parent=1 // loop_header_branch
      %16 = sbr.rel (%p14) target = $region8
    $region5: #{forward.1} parent=1 // loop_body
      %s18 = ssub.s32 %s13, 1
      %s19 = ssub.s32 %s13, 2
      %s20 = sadd.s32 %s13, 1
      %s21 = ssub.s32 %s13, %s20
      %p22 = scmp.eq.s32.totalorder %s21, 0
      %s24 = sadd.s32 %s23, 1
      %s25 = scalar_select %p22, %s23, %s24
      %p28 = pneg %p22
      %p29 = scmp.eq.s32.totalorder %s13, 1
      %p30 = por %p28, %p29
      %p31 = scmp.ne.s32.totalorder %s23, %s26
      %p32 = scmp.eq.s32.totalorder %s13, 0
      %p33 = por %p31, %p32
      %p34 = scmp.ne.s32.totalorder %s23, %s26
      %p35 = scmp.eq.s32.totalorder %s18, 1
      %p36 = por %p34, %p35
      %p37 = scmp.ne.s32.totalorder %s26, %s27
      %p38 = scmp.eq.s32.totalorder %s18, 0
      %p39 = por %p37, %p38
      %p40 = scmp.ne.s32.totalorder %s26, %s27
      %p41 = scmp.eq.s32.totalorder %s19, 1
      %p42 = por %p40, %p41
      %p44 = scmp.ne.s32.totalorder %s27, %s43
      %p45 = scmp.eq.s32.totalorder %s19, 0
      %p46 = por %p44, %p45
      %s48 = sadd.s32 %s47, 1
      %p51 = scmp.eq.s32.totalorder %s13, 1
      %p52 = scmp.ne.s32.totalorder %s47, %s49
      %p53 = scmp.eq.s32.totalorder %s13, 0
      %p54 = por %p52, %p53
      %p55 = scmp.ne.s32.totalorder %s47, %s49
      %p56 = scmp.eq.s32.totalorder %s18, 1
      %p57 = por %p55, %p56
      %p58 = scmp.ne.s32.totalorder %s49, %s50
      %p59 = scmp.eq.s32.totalorder %s18, 0
      %p60 = por %p58, %p59
      %p61 = scmp.ne.s32.totalorder %s49, %s50
      %p62 = scmp.eq.s32.totalorder %s19, 1
      %p63 = por %p61, %p62
      %p65 = scmp.ne.s32.totalorder %s50, %s64
      %p66 = scmp.eq.s32.totalorder %s19, 0
      %p67 = por %p65, %p66
      %s69 = sadd.s32 %s68, 1
      %p72 = scmp.eq.s32.totalorder %s13, 1
      %p73 = scmp.ne.s32.totalorder %s68, %s70
      %p74 = scmp.eq.s32.totalorder %s13, 0
      %p75 = por %p73, %p74
      %p76 = scmp.ne.s32.totalorder %s68, %s70
      %p77 = scmp.eq.s32.totalorder %s18, 1
      %p78 = por %p76, %p77
      %p79 = scmp.ne.s32.totalorder %s70, %s71
      %p80 = scmp.eq.s32.totalorder %s18, 0
      %p81 = por %p79, %p80
      %p82 = scmp.ne.s32.totalorder %s70, %s71
      %p83 = scmp.eq.s32.totalorder %s19, 1
      %p84 = por %p82, %p83
      %p86 = scmp.ne.s32.totalorder %s71, %s85
      %p87 = scmp.eq.s32.totalorder %s19, 0
      %p88 = por %p86, %p87
      %s89 = ssub.s32 %s13, %s20
      %p90 = scmp.eq.s32.totalorder %s89, 0
      %s92 = sadd.s32 %s91, 1
      %s93 = scalar_select %p90, %s91, %s92
      %p96 = pneg %p90
      %p97 = scmp.eq.s32.totalorder %s13, 1
      %p98 = por %p96, %p97
      %p99 = scmp.ne.s32.totalorder %s91, %s94
      %p100 = scmp.eq.s32.totalorder %s13, 0
      %p101 = por %p99, %p100
      %p102 = scmp.ne.s32.totalorder %s91, %s94
      %p103 = scmp.eq.s32.totalorder %s18, 1
      %p104 = por %p102, %p103
      %p105 = scmp.ne.s32.totalorder %s94, %s95
      %p106 = scmp.eq.s32.totalorder %s18, 0
      %p107 = por %p105, %p106
      %p108 = scmp.ne.s32.totalorder %s94, %s95
      %p109 = scmp.eq.s32.totalorder %s19, 1
      %p110 = por %p108, %p109
      %p112 = scmp.ne.s32.totalorder %s95, %s111
      %p113 = scmp.eq.s32.totalorder %s19, 0
      %p114 = por %p112, %p113
      %p115 = scmp.le.s32.totalorder 1, %s13
      %p116 = scmp.lt.s32.totalorder %s13, 3
      %p117 = pnand %p115, %p116
      %p118 = pneg %p117
      // Predicated region
      $region9: #{forward.1} parent=5 // pred_check
        _
      $region10: #{forward.1} parent=5 // pred_check_branch
        %120 = sbr.rel (%p117) target = $region12
      $region11: #{forward.1} parent=5 // pred_region
        %s121 = ssub.s32 %s13, 1
        // Predicated region
        $region13: #{forward.1} parent=11 // pred_check
          %p122 = pneg %p60
        $region14: #{forward.1} parent=11 // pred_check_branch
          %124 = sbr.rel (%p122) target = $region16
        $region15: #{forward.1} parent=11 // pred_region
          _
        $region16: #{forward.1} parent=11 // pred_fallthru
          _
        // Predicated region
        $region17: #{forward.1} parent=11 // pred_check
          %p125 = pneg %p81
        $region18: #{forward.1} parent=11 // pred_check_branch
          %127 = sbr.rel (%p125) target = $region20
        $region19: #{forward.1} parent=11 // pred_region
          %129 = vsyncadd [#allocation3], 0
          %s130 = sshll.u32 %s2, 4
          %s131 = int_to_ptr.hbm [resolvable:$true] %s130
          %s132 = sshll.u32 [#allocation2], 4
          %s133 = int_to_ptr.vmem [resolvable:$true] %s132
          %138 = dma.hbm_to_vmem [thread:$0]  %s131, 2048, %s133, [#allocation3], 128, 128, 8
        $region20: #{forward.1} parent=11 // pred_fallthru
          _
      $region12: #{forward.1} parent=5 // pred_fallthru
        _
      %p139 = scmp.lt.s32.totalorder %s13, 2
      // Predicated region
      $region21: #{forward.1} parent=5 // pred_check
        %p140 = pneg %p139
      $region22: #{forward.1} parent=5 // pred_check_branch
        %142 = sbr.rel (%p140) target = $region24
      $region23: #{forward.1} parent=5 // pred_region
        // Predicated region
        $region25: #{forward.1} parent=23 // pred_check
          %p143 = pneg %p33
        $region26: #{forward.1} parent=23 // pred_check_branch
          %145 = sbr.rel (%p143) target = $region28
        $region27: #{forward.1} parent=23 // pred_region
          %p146 = scmp.lt.s32.totalorder %s13, 1
          %s147 = scalar_select %p146, %s13, 1
          %s148 = smul.addr %s147, 8
          %s149 = scalar_lea.vmem %s0, %s148
        $region28: #{forward.1} parent=23 // pred_fallthru
          _
      $region24: #{forward.1} parent=5 // pred_fallthru
        _
      %p150 = scmp.le.s32.totalorder 1, %s13
      %p151 = scmp.lt.s32.totalorder %s13, 3
      %p152 = pnand %p150, %p151
      %p153 = pneg %p152
      // Predicated region
      $region29: #{forward.1} parent=5 // pred_check
        _
      $region30: #{forward.1} parent=5 // pred_check_branch
        %155 = sbr.rel (%p152) target = $region32
      $region31: #{forward.1} parent=5 // pred_region
        %s156 = ssub.s32 %s13, 1
        // Predicated region
        $region33: #{forward.1} parent=31 // pred_check
          %p157 = pneg %p81
        $region34: #{forward.1} parent=31 // pred_check_branch
          %159 = sbr.rel (%p157) target = $region36
        $region35: #{forward.1} parent=31 // pred_region
          %161 = dma.done [#allocation3], 2048
        $region36: #{forward.1} parent=31 // pred_fallthru
          _
        %p162 = scmp.lt.s32.totalorder %s18, 1
        %s163 = scalar_select %p162, %s18, 1
        %s164 = smul.addr %s163, 8
        %s165 = scalar_lea.vmem %s0, %s164
        %p166 = pneg %p39
        %p167 = pneg %p36
        %p168 = pneg %p60
        %p169 = pneg %p57
        %p170 = pneg %p81
        %p171 = pneg %p78
        %p172 = pneg %p107
        %p173 = pneg %p104
        %s174 = sand.u32 %s94, 1
        %s175 = scalar_lea.sflag [#allocation4], %s174
        %s176 = sand.u32 %s94, 1
        %s177 = smul.addr %s176, 8
        %s178 = scalar_lea.vmem [#allocation5], %s177
        %p179 = scmp.lt.s32.totalorder %s18, 1
        %s180 = scalar_select %p179, %s18, 1
        %s181 = smul.addr %s180, 8
        %s182 = scalar_lea.vmem %s0, %s181
        %v183 = vld [vmem:[%s182] sm:$0xff]
        %v184 = vld [vmem:[%s1] sm:$0x1]
        %185 = vset.pattern.permute.xlu0 0
        %186 = vperm.xlu0 %185, %v183
        %v187 = vpop.permute.xlu0 %186
        %v188 = vperm.slane %v184, 0
        %vm189 = vcmp.eq.s32.totalorder %v187, %v188
        %v190 = vsel %vm189, 1, 0
        %v191 = vcvt.s32.f32 %v190
        %v192 = vld [vmem:[#allocation2] sm:$0xff]
        %v193 = vld [vmem:[#allocation2 + $0x8] sm:$0xff]
        %v194 = vld [vmem:[#allocation2 + $0x10] sm:$0xff]
        %v195 = vld [vmem:[#allocation2 + $0x18] sm:$0xff]
        %v196 = vld [vmem:[#allocation2 + $0x20] sm:$0xff]
        %v197 = vld [vmem:[#allocation2 + $0x28] sm:$0xff]
        %v198 = vld [vmem:[#allocation2 + $0x30] sm:$0xff]
        %v199 = vld [vmem:[#allocation2 + $0x38] sm:$0xff]
        %v200 = vld [vmem:[#allocation2 + $0x40] sm:$0xff]
        %v201 = vld [vmem:[#allocation2 + $0x48] sm:$0xff]
        %v202 = vld [vmem:[#allocation2 + $0x50] sm:$0xff]
        %v203 = vld [vmem:[#allocation2 + $0x58] sm:$0xff]
        %v204 = vld [vmem:[#allocation2 + $0x60] sm:$0xff]
        %v205 = vld [vmem:[#allocation2 + $0x68] sm:$0xff]
        %v206 = vld [vmem:[#allocation2 + $0x70] sm:$0xff]
        %v207 = vld [vmem:[#allocation2 + $0x78] sm:$0xff]
        %208 = vmatpush.msra.mxu0 %v207
        %209 = vmatpush.msra.mxu0 %v206
        %210 = vmatpush.msra.mxu0 %v205
        %211 = vmatpush.msra.mxu0 %v204
        %212 = vmatpush.msra.mxu0 %v203
        %213 = vmatpush.msra.mxu0 %v202
        %214 = vmatpush.msra.mxu0 %v201
        %215 = vmatpush.msra.mxu0 %v200
        %216 = vmatpush.msra.mxu0 %v199
        %217 = vmatpush.msra.mxu0 %v198
        %218 = vmatpush.msra.mxu0 %v197
        %219 = vmatpush.msra.mxu0 %v196
        %220 = vmatpush.msra.mxu0 %v195
        %221 = vmatpush.msra.mxu0 %v194
        %222 = vmatpush.msra.mxu0 %v193
        %223 = vmatpush.msra.mxu0 %v192
        %224 = vmatmul.f32.gmra.mxu0 %v191
        %v225 = vpop.f32.mrf.mxu0
        %v226 = vadd.f32 0.0, %v225
        %227 = vdwg.mxu0
        %vm228 = vcmask 261120
        %229 = vst.msk [vmem:[%s178] sm:$0xff] %vm228, %v226
        %s230 = sand.u32 %s94, 1
        %s231 = scalar_lea.sflag [#allocation4], %s230
        %s232 = sand.u32 %s94, 1
        %s233 = smul.addr %s232, 8
        %s234 = scalar_lea.vmem [#allocation5], %s233
        // Predicated region
        $region37: #{forward.1} parent=31 // pred_check
          %p235 = pneg %p104
        $region38: #{forward.1} parent=31 // pred_check_branch
          %237 = sbr.rel (%p235) target = $region40
        $region39: #{forward.1} parent=31 // pred_region
          %239 = vsyncadd %s231, 0
          %s240 = smul.addr %s18, 8
          %s241 = scalar_lea.hbm %s3, %s240
          %s243 = sshll.u32 %s234, 4
          %s244 = int_to_ptr.vmem [resolvable:$true] %s243
          %s245 = sshll.u32 %s241, 4
          %s246 = int_to_ptr.hbm [resolvable:$true] %s245
          %248 = dma.vmem_to_hbm [thread:$0]  %s244, 128, %s246, %s231
        $region40: #{forward.1} parent=31 // pred_fallthru
          _
      $region32: #{forward.1} parent=5 // pred_fallthru
        _
      %p249 = scmp.le.s32.totalorder 2, %s13
      // Predicated region
      $region41: #{forward.1} parent=5 // pred_check
        %p250 = pneg %p249
      $region42: #{forward.1} parent=5 // pred_check_branch
        %252 = sbr.rel (%p250) target = $region44
      $region43: #{forward.1} parent=5 // pred_region
        %s253 = ssub.s32 %s13, 2
        // Predicated region
        $region45: #{forward.1} parent=43 // pred_check
          %p254 = pneg %p110
        $region46: #{forward.1} parent=43 // pred_check_branch
          %256 = sbr.rel (%p254) target = $region48
        $region47: #{forward.1} parent=43 // pred_region
          %s257 = sand.u32 %s95, 1
          %s258 = scalar_lea.sflag [#allocation4], %s257
          %s259 = sand.u32 %s95, 1
          %s260 = smul.addr %s259, 8
          %s261 = scalar_lea.vmem [#allocation5], %s260
          %263 = dma.done %s258, 128
        $region48: #{forward.1} parent=43 // pred_fallthru
          _
      $region44: #{forward.1} parent=5 // pred_fallthru
        _
    $region6: #{forward.1} parent=1 // loop_footer
      %s17 = sadd.s32 1, %s13
    $region7: #{forward.1} parent=1 // loop_footer_branch
      %12 = sbr.rel target = $region3
    $region8: #{forward.1} parent=1 // loop_exit
      _
    %264 = vsyncpa [#allocation3], 1
    %s265 = scalar_lea.sflag [#allocation3], 1
    %266 = vsyncpa %s265, 1
    %267 = vsyncpa [#allocation4], 1
    %s268 = scalar_lea.sflag [#allocation4], 1
    %269 = vsyncpa %s268, 1

</llo_original>
